<compile_context>
chip_gen: v7x
topology: tpu7x:2x2x1
jax: 0.10.0
libtpu: 0.0.40
codegen_flags: <defaults>
</compile_context>

<pallas_src>
import functools

import jax
import jax.numpy as jnp
import numpy as np
from jax.experimental import pallas as pl
from jax.experimental.pallas import tpu as pltpu


# ---------------------------------------------------------------------------
# Generation-aware VMEM budgets.
# ---------------------------------------------------------------------------
_VMEM_CAP_CACHE = None


def _physical_vmem_bytes():
    """Physical per-core VMEM (128 MiB on v5e/v6e, 64 MiB on v7x)."""
    global _VMEM_CAP_CACHE
    if _VMEM_CAP_CACHE is None:
        cap = 64 << 20  # conservative default: assume the smallest (v7x-sized)
        try:
            reported = int(pltpu.get_tpu_info().vmem_capacity_bytes)
            if reported > 0:
                cap = reported
        except Exception:
            pass
        _VMEM_CAP_CACHE = cap
    return _VMEM_CAP_CACHE


def _budgets():
    """Returns (single_pass_gate, vmem_clamp, two_pass_tile_target) in bytes."""
    cap = _physical_vmem_bytes()
    if cap >= (128 << 20):
        # v5e / v6e: 128 MiB physical VMEM -- keep mid-size feature maps on the
        # 1x-HBM-traffic single-pass path, and use big streaming tiles.
        return (96 << 20, 100 << 20, 12 << 20)
    # v7x: 64 MiB per TensorCore -- leave headroom for compiler scratch and
    # double buffering; smaller streaming tiles keep both TCs load-balanced.
    return (40 << 20, 52 << 20, 4 << 20)


def _vmem_limit_bytes(live_bytes, clamp):
    # Headroom for compiler-internal scratch; never below the 32 MiB scoped
    # default, never above the generation-aware clamp.
    return int(min(max(live_bytes + (8 << 20), 32 << 20), clamp))


# ---------------------------------------------------------------------------
# Single-pass kernel: whole (C, HW) feature map per batch resident in VMEM.
# ---------------------------------------------------------------------------
def _single_pass_kernel(x_ref, w1_ref, w2_ref, o_ref, *, hw):
    # x_ref: (C, HW) in native dtype (batch dim squeezed out by the BlockSpec).
    x = x_ref[...]

    # Global pooled stats.  Reducing over the lane (HW) axis yields
    # sublane-major (C, 1) results -- the natural layout for broadcasting back
    # over HW below, so no relayouts/transposes are needed.  Stats + MLP in
    # f32; the big tile itself is never upcast.
    avg = jnp.sum(x, axis=-1, keepdims=True, dtype=jnp.float32) * (1.0 / hw)  # (C, 1)
    mx = jnp.max(x, axis=-1, keepdims=True).astype(jnp.float32)               # (C, 1)
    pooled = jnp.concatenate([avg, mx], axis=1)                               # (C, 2)

    w1 = w1_ref[...].astype(jnp.float32)   # (Cr, C)
    w2 = w2_ref[...].astype(jnp.float32)   # (C, Cr)

    # Shared fc1 -> relu -> fc2 applied to both pooled columns at once; summing
    # the columns afterwards == fc2(relu(fc1(avg))) + fc2(relu(fc1(max))).
    h = jnp.maximum(jnp.dot(w1, pooled, preferred_element_type=jnp.float32), 0.0)  # (Cr, 2)
    out2 = jnp.dot(w2, h, preferred_element_type=jnp.float32)                      # (C, 2)
    scale = jax.nn.sigmoid(out2[:, 0:1] + out2[:, 1:2])                            # (C, 1)

    o_ref[...] = (scale.astype(x.dtype) * x).astype(o_ref.dtype)


def _channel_attention_single_pass(x_flat, w1, w2):
    N, C, HW = x_flat.shape
    Cr = w1.shape[0]
    dtype_bytes = x_flat.dtype.itemsize
    gate, clamp, _ = _budgets()

    tile_bytes = C * HW * dtype_bytes
    weight_bytes = w1.size * w1.dtype.itemsize + w2.size * w2.dtype.itemsize
    # Input + output full-feature-map tiles, each double-buffered, + weights x2.
    live_bytes = 4 * tile_bytes + 2 * weight_bytes
    assert live_bytes <= gate, (
        "single-pass block does not fit the VMEM budget; use the two-pass path")

    cost = pl.CostEstimate(
        flops=int(4 * N * C * HW + 8 * N * C * Cr),
        transcendentals=int(N * C),
        bytes_accessed=int(2 * N * C * HW * dtype_bytes + 2 * weight_bytes),
    )

    return pl.pallas_call(
        functools.partial(_single_pass_kernel, hw=HW),
        out_shape=jax.ShapeDtypeStruct((N, C, HW), x_flat.dtype),
        grid_spec=pltpu.PrefetchScalarGridSpec(
            num_scalar_prefetch=0,
            grid=(N,),
            in_specs=[
                pl.BlockSpec((None, C, HW), lambda b: (b, 0, 0)),
                pl.BlockSpec((Cr, C), lambda b: (0, 0)),
                pl.BlockSpec((C, Cr), lambda b: (0, 0)),
            ],
            out_specs=pl.BlockSpec((None, C, HW), lambda b: (b, 0, 0)),
        ),
        compiler_params=pltpu.CompilerParams(
            dimension_semantics=("parallel",),
            vmem_limit_bytes=_vmem_limit_bytes(live_bytes, clamp),
        ),
        cost_estimate=cost,
    )(x_flat, w1, w2)


# ---------------------------------------------------------------------------
# Two-pass (tiled) path: fused reduce+MLP kernel, then a streaming apply kernel.
# ---------------------------------------------------------------------------
def _reduce_scale_kernel(x_ref, w1_ref, w2_ref, scale_ref, sum_acc, max_acc,
                         *, hw, hw_tile, n_hw):
    # x_ref: (C, hw_tile).  sum_acc/max_acc: (C, 1) f32 VMEM scratch, carried
    # across the innermost ("arbitrary") HW grid axis.  scale_ref: (C, 1)
    # output, resident across the HW axis and written only on the last tile.
    s = pl.program_id(1)
    last = n_hw - 1
    x = x_ref[...]

    @pl.when(s == 0)
    def _init():
        sum_acc[...] = jnp.zeros_like(sum_acc)
        max_acc[...] = jnp.full_like(max_acc, -jnp.inf)

    def _accumulate(x_sum_in, x_max_in):
        sum_acc[...] = sum_acc[...] + jnp.sum(
            x_sum_in, axis=-1, keepdims=True, dtype=jnp.float32)
        max_acc[...] = jnp.maximum(
            max_acc[...],
            jnp.max(x_max_in, axis=-1, keepdims=True).astype(jnp.float32))

    if hw % hw_tile == 0:
        # Every tile is fully in-bounds: no masking anywhere.
        _accumulate(x, x)
    else:
        # Masking is restricted to the final (padded) tile; all full tiles run
        # the cheap unmasked accumulate so the pass stays HBM-bound.
        @pl.when(s < last)
        def _full_tile():
            _accumulate(x, x)

        @pl.when(s == last)
        def _tail_tile():
            valid_cols = hw - last * hw_tile  # static Python int, >= 1
            valid = jax.lax.broadcasted_iota(jnp.int32, x.shape, 1) < valid_cols
            xs = jnp.where(valid, x, jnp.zeros((), dtype=x.dtype))
            xm = jnp.where(valid, x, jnp.full((), -jnp.inf, dtype=x.dtype))
            _accumulate(xs, xm)

    @pl.when(s == last)
    def _finalize():
        # Tiny shared MLP fused into the last HW step: sums/maxes never touch
        # HBM and no separate JAX dispatch is needed.
        avg = sum_acc[...] * (1.0 / hw)                       # (C, 1) f32
        pooled = jnp.concatenate([avg, max_acc[...]], axis=1)  # (C, 2)
        w1 = w1_ref[...].astype(jnp.float32)                   # (Cr, C)
        w2 = w2_ref[...].astype(jnp.float32)                   # (C, Cr)
        h = jnp.maximum(
            jnp.dot(w1, pooled, preferred_element_type=jnp.float32), 0.0)  # (Cr, 2)
        out2 = jnp.dot(w2, h, preferred_element_type=jnp.float32)          # (C, 2)
        scale_ref[...] = jax.nn.sigmoid(
            out2[:, 0:1] + out2[:, 1:2]).astype(scale_ref.dtype)           # (C, 1)


def _apply_kernel(x_ref, scale_ref, o_ref):
    # x_ref: (C, hw_tile); scale_ref: (C, 1); broadcast multiply over lanes.
    o_ref[...] = (x_ref[...] * scale_ref[...]).astype(o_ref.dtype)


def _pick_hw_tile(C, HW, dtype_bytes, target_tile_bytes):
    t = max(128, (target_tile_bytes // max(C * dtype_bytes, 1)) // 128 * 128)
    t = min(t, pl.cdiv(HW, 128) * 128)
    return int(t)


def _channel_attention_two_pass(x_flat, w1, w2, hw_tile=None):
    N, C, HW = x_flat.shape
    Cr = w1.shape[0]
    dtype_bytes = x_flat.dtype.itemsize
    _, clamp, tile_target = _budgets()
    if hw_tile is None:
        hw_tile = _pick_hw_tile(C, HW, dtype_bytes, tile_target)
    n_hw = int(pl.cdiv(HW, hw_tile))
    tile_bytes = C * hw_tile * dtype_bytes
    weight_bytes = w1.size * w1.dtype.itemsize + w2.size * w2.dtype.itemsize

    # Pass 1: per-(batch, channel) sum/max accumulated in VMEM scratch over the
    # "arbitrary" HW axis; the shared MLP runs in-kernel on the last tile and
    # the per-channel sigmoid scale is the only pass-1 output.
    reduce_cost = pl.CostEstimate(
        flops=int(2 * N * C * HW + 8 * N * C * Cr),
        transcendentals=int(N * C),
        bytes_accessed=int(N * C * HW * dtype_bytes + N * C * dtype_bytes
                           + 2 * weight_bytes),
    )
    scale = pl.pallas_call(
        functools.partial(_reduce_scale_kernel, hw=HW, hw_tile=hw_tile, n_hw=n_hw),
        out_shape=jax.ShapeDtypeStruct((N, C, 1), x_flat.dtype),
        grid_spec=pltpu.PrefetchScalarGridSpec(
            num_scalar_prefetch=0,
            grid=(N, n_hw),
            in_specs=[
                pl.BlockSpec((None, C, hw_tile), lambda b, s: (b, 0, s)),
                pl.BlockSpec((Cr, C), lambda b, s: (0, 0)),
                pl.BlockSpec((C, Cr), lambda b, s: (0, 0)),
            ],
            out_specs=pl.BlockSpec((None, C, 1), lambda b, s: (b, 0, 0)),
            scratch_shapes=[
                pltpu.VMEM((C, 1), jnp.float32),   # running sum
                pltpu.VMEM((C, 1), jnp.float32),   # running max
            ],
        ),
        compiler_params=pltpu.CompilerParams(
            dimension_semantics=("parallel", "arbitrary"),
            vmem_limit_bytes=_vmem_limit_bytes(
                2 * tile_bytes + 2 * weight_bytes + (1 << 20), clamp),
        ),
        cost_estimate=reduce_cost,
    )(x_flat, w1, w2)

    # Pass 2: lane-dense streaming apply of the per-channel scale.  Both grid
    # axes are independent -> plenty of parallel steps for 2-TC chips (v7x).
    apply_cost = pl.CostEstimate(
        flops=int(N * C * HW),
        transcendentals=0,
        bytes_accessed=int(2 * N * C * HW * dtype_bytes + N * C * dtype_bytes),
    )
    out = pl.pallas_call(
        _apply_kernel,
        out_shape=jax.ShapeDtypeStruct((N, C, HW), x_flat.dtype),
        grid_spec=pltpu.PrefetchScalarGridSpec(
            num_scalar_prefetch=0,
            grid=(N, n_hw),
            in_specs=[
                pl.BlockSpec((None, C, hw_tile), lambda b, s: (b, 0, s)),
                pl.BlockSpec((None, C, 1), lambda b, s: (b, 0, 0)),
            ],
            out_specs=pl.BlockSpec((None, C, hw_tile), lambda b, s: (b, 0, s)),
        ),
        compiler_params=pltpu.CompilerParams(
            dimension_semantics=("parallel", "parallel"),
            vmem_limit_bytes=_vmem_limit_bytes(4 * tile_bytes, clamp),
        ),
        cost_estimate=apply_cost,
    )(x_flat, scale)
    return out


# ---------------------------------------------------------------------------
# Public wrapper + pure-JAX reference.
# ---------------------------------------------------------------------------
def channel_attention(x, w1, w2, *, force_two_pass=False, hw_tile=None):
    """CBAM ChannelAttention forward.

    x: (N, C, H, W).  w1: (C//16, C) == fc1 weight.  w2: (C, C//16) == fc2 weight.
    """
    assert jnp.issubdtype(x.dtype, jnp.floating), "floating-point inputs only"
    N, C, H, W = x.shape
    HW = H * W
    x_flat = x.reshape(N, C, HW)
    dtype_bytes = x.dtype.itemsize

    gate, _, _ = _budgets()
    batch_bytes = C * HW * dtype_bytes
    weight_bytes = w1.size * w1.dtype.itemsize + w2.size * w2.dtype.itemsize
    live_bytes = 4 * batch_bytes + 2 * weight_bytes   # double-buffered in + out

    # Minimum-traffic single-pass path whenever the per-batch block fits the
    # generation-aware VMEM gate (small unaligned HW included -- the masked
    # store cost is identical on the two-pass apply kernel anyway).
    vmem_ok = live_bytes <= gate

    # On the 64-MiB / 2-TC generation (v7x) a grid of (1,) has zero pipeline
    # overlap and leaves one TensorCore idle; prefer the many-step two-pass
    # grid there once the feature map is big enough for pipelining to matter.
    small_vmem_part = _physical_vmem_bytes() < (128 << 20)
    prefer_two_pass = small_vmem_part and N == 1 and batch_bytes >= (2 << 20)

    if force_two_pass or hw_tile is not None or not vmem_ok or prefer_two_pass:
        out = _channel_attention_two_pass(x_flat, w1, w2, hw_tile)
    else:
        out = _channel_attention_single_pass(x_flat, w1, w2)
    return out.reshape(N, C, H, W)


def channel_attention_ref(x, w1, w2):
    # Pure-JAX reference mirroring the PyTorch module.
    avg = jnp.mean(x, axis=(2, 3))                  # (N, C)
    mx = jnp.max(x, axis=(2, 3))                    # (N, C)

    def mlp(p):
        return jnp.maximum(p @ w1.T, 0.0) @ w2.T

    out = mlp(avg) + mlp(mx)                        # (N, C)
    return jax.nn.sigmoid(out)[:, :, None, None] * x


if __name__ == "__main__":
    key = jax.random.PRNGKey(0)
    k1, k2, k3, k4, k5, k6 = jax.random.split(key, 6)

    # Case A: HW = 256 -> single-pass path (fits every generation's VMEM gate).
    N, C, H, W = 2, 64, 16, 16
    Cr = C // 16
    x = jax.random.normal(k1, (N, C, H, W), dtype=jnp.float32)
    # Conv2d(C, Cr, 1, bias=False) weight (Cr, C, 1, 1) -> (Cr, C).
    w1 = jax.random.normal(k2, (Cr, C), dtype=jnp.float32) * 0.1
    # Conv2d(Cr, C, 1, bias=False) weight (C, Cr, 1, 1) -> (C, Cr).
    w2 = jax.random.normal(k3, (C, Cr), dtype=jnp.float32) * 0.1

    y = jax.block_until_ready(channel_attention(x, w1, w2))
    np.testing.assert_allclose(np.asarray(y),
                               np.asarray(channel_attention_ref(x, w1, w2)),
                               rtol=1e-5, atol=1e-5)

    # Same inputs through the tiled two-pass path (evenly dividing HW tiles,
    # fused in-kernel MLP, no masking).
    y2 = jax.block_until_ready(
        channel_attention(x, w1, w2, force_two_pass=True, hw_tile=128))
    np.testing.assert_allclose(np.asarray(y2),
                               np.asarray(channel_attention_ref(x, w1, w2)),
                               rtol=1e-5, atol=1e-5)

    # Case B: HW = 144 (not a multiple of 128).
    N2, C2, H2, W2 = 2, 32, 12, 12
    Cr2 = C2 // 16
    xb = jax.random.normal(k4, (N2, C2, H2, W2), dtype=jnp.float32)
    w1b = jax.random.normal(k5, (Cr2, C2), dtype=jnp.float32) * 0.1
    w2b = jax.random.normal(k6, (C2, Cr2), dtype=jnp.float32) * 0.1

    # Default routing: tiny feature map -> single-pass (no masked-store detour).
    yb = jax.block_until_ready(channel_attention(xb, w1b, w2b))
    np.testing.assert_allclose(np.asarray(yb),
                               np.asarray(channel_attention_ref(xb, w1b, w2b)),
                               rtol=1e-5, atol=1e-5)

    # Forced two-pass with hw_tile=128: exercises the last-tile-only masking in
    # the fused reduce kernel.
    yb2 = jax.block_until_ready(channel_attention(xb, w1b, w2b, hw_tile=128))
    np.testing.assert_allclose(np.asarray(yb2),
                               np.asarray(channel_attention_ref(xb, w1b, w2b)),
                               rtol=1e-5, atol=1e-5)

    print("KERNEL_OK")
</pallas_src>

<mosaic_0001>
module attributes {stable_mosaic.version = 11 : i64} {
  func.func @_single_pass_kernel(%arg0: i32, %arg1: memref<1x64x256xf32, #tpu.memory_space<vmem>>, %arg2: memref<4x64xf32, #tpu.memory_space<vmem>>, %arg3: memref<64x4xf32, #tpu.memory_space<vmem>>, %arg4: memref<1x64x256xf32, #tpu.memory_space<vmem>>) attributes {dimension_semantics = [#tpu.dimension_semantics<parallel>], iteration_bounds = array<i64: 2>, scalar_prefetch = 0 : i64, scratch_operands = 0 : i64, tpu.core_type = #tpu.core_type<tc>, window_params = [{transform_indices = @transform_0, window_bounds = array<i64: 1, 64, 256>}, {pipeline_mode = #tpu.pipeline_mode<synchronous>, transform_indices = @transform_1, window_bounds = array<i64: 4, 64>}, {pipeline_mode = #tpu.pipeline_mode<synchronous>, transform_indices = @transform_2, window_bounds = array<i64: 64, 4>}, {transform_indices = @transform_3, window_bounds = array<i64: 1, 64, 256>}]} {
    %c0 = arith.constant 0 : index
    %c0_0 = arith.constant 0 : index
    %c0_1 = arith.constant 0 : index
    %0 = vector.load %arg1[%c0, %c0_0, %c0_1] : memref<1x64x256xf32, #tpu.memory_space<vmem>>, vector<1x64x256xf32>
    %1 = vector.shape_cast %0 : vector<1x64x256xf32> to vector<64x256xf32>
    %cst = arith.constant dense<0.000000e+00> : vector<64xf32>
    %2 = vector.multi_reduction <add>, %1, %cst [1] : vector<64x256xf32> to vector<64xf32>
    %3 = vector.shape_cast %2 : vector<64xf32> to vector<64x1xf32>
    %cst_2 = arith.constant 3.906250e-03 : f32
    %4 = vector.broadcast %cst_2 : f32 to vector<64x1xf32>
    %5 = arith.mulf %3, %4 : vector<64x1xf32>
    %cst_3 = arith.constant dense<0xFF800000> : vector<64xf32>
    %6 = vector.multi_reduction <maximumf>, %1, %cst_3 [1] : vector<64x256xf32> to vector<64xf32>
    %7 = vector.shape_cast %6 : vector<64xf32> to vector<64x1xf32>
    %8 = tpu.concatenate %5, %7 in 1 : vector<64x1xf32>, vector<64x1xf32> -> vector<64x2xf32>
    %c0_4 = arith.constant 0 : index
    %c0_5 = arith.constant 0 : index
    %9 = vector.load %arg2[%c0_4, %c0_5] : memref<4x64xf32, #tpu.memory_space<vmem>>, vector<4x64xf32>
    %c0_6 = arith.constant 0 : index
    %c0_7 = arith.constant 0 : index
    %10 = vector.load %arg3[%c0_6, %c0_7] : memref<64x4xf32, #tpu.memory_space<vmem>>, vector<64x4xf32>
    %cst_8 = arith.constant dense<0.000000e+00> : vector<4x2xf32>
    %11 = tpu.matmul %9, %8, %cst_8 {dimension_numbers = #tpu.dot_dimension_numbers<[1], [0], [0], [1], [0, 0, 1, 1], [], []>} : vector<4x64xf32>, vector<64x2xf32>, vector<4x2xf32> -> vector<4x2xf32>
    %cst_9 = arith.constant 0.000000e+00 : f32
    %12 = vector.broadcast %cst_9 : f32 to vector<4x2xf32>
    %13 = arith.maximumf %11, %12 : vector<4x2xf32>
    %cst_10 = arith.constant dense<0.000000e+00> : vector<64x2xf32>
    %14 = tpu.matmul %10, %13, %cst_10 {dimension_numbers = #tpu.dot_dimension_numbers<[1], [0], [0], [1], [0, 0, 1, 1], [], []>} : vector<64x4xf32>, vector<4x2xf32>, vector<64x2xf32> -> vector<64x2xf32>
    %15 = vector.extract_strided_slice %14 {offsets = [0, 0], sizes = [64, 1], strides = [1, 1]} : vector<64x2xf32> to vector<64x1xf32>
    %16 = vector.extract_strided_slice %14 {offsets = [0, 1], sizes = [64, 1], strides = [1, 1]} : vector<64x2xf32> to vector<64x1xf32>
    %17 = arith.addf %15, %16 : vector<64x1xf32>
    %18 = arith.negf %17 : vector<64x1xf32>
    %19 = math.exp %18 : vector<64x1xf32>
    %cst_11 = arith.constant 1.000000e+00 : f32
    %20 = vector.broadcast %cst_11 : f32 to vector<64x1xf32>
    %21 = arith.addf %20, %19 : vector<64x1xf32>
    %22 = arith.divf %20, %21 : vector<64x1xf32>
    %23 = vector.broadcast %22 : vector<64x1xf32> to vector<64x256xf32>
    %24 = arith.mulf %23, %1 : vector<64x256xf32>
    %c0_12 = arith.constant 0 : index
    %c0_13 = arith.constant 0 : index
    %c0_14 = arith.constant 0 : index
    %25 = vector.load %arg4[%c0_12, %c0_13, %c0_14] : memref<1x64x256xf32, #tpu.memory_space<vmem>>, vector<1x64x256xf32>
    %26 = vector.shape_cast %25 : vector<1x64x256xf32> to vector<64x256xf32>
    %27 = vector.shape_cast %24 : vector<64x256xf32> to vector<1x64x256xf32>
    tpu.vector_store %arg4[%c0_12, %c0_13, %c0_14], %27 {strides = array<i32>} : memref<1x64x256xf32, #tpu.memory_space<vmem>>, vector<1x64x256xf32>,
    return
  }
  func.func @transform_0(%arg0: i32) -> (i32, i32, i32) {
    %c0_i32 = arith.constant 0 : i32
    %c0_i32_0 = arith.constant 0 : i32
    %c0_i32_1 = arith.constant 0 : i32
    return %arg0, %c0_i32, %c0_i32_0 : i32, i32, i32
  }
  func.func @transform_1(%arg0: i32) -> (i32, i32) {
    %c0_i32 = arith.constant 0 : i32
    %c0_i32_0 = arith.constant 0 : i32
    %c0_i32_1 = arith.constant 0 : i32
    return %c0_i32, %c0_i32_0 : i32, i32
  }
  func.func @transform_2(%arg0: i32) -> (i32, i32) {
    %c0_i32 = arith.constant 0 : i32
    %c0_i32_0 = arith.constant 0 : i32
    %c0_i32_1 = arith.constant 0 : i32
    return %c0_i32, %c0_i32_0 : i32, i32
  }
  func.func @transform_3(%arg0: i32) -> (i32, i32, i32) {
    %c0_i32 = arith.constant 0 : i32
    %c0_i32_0 = arith.constant 0 : i32
    %c0_i32_1 = arith.constant 0 : i32
    return %arg0, %c0_i32, %c0_i32_0 : i32, i32, i32
  }
}

</mosaic_0001>

<llo_original>
// kernel: tpu_custom_call.1
$region0: #{tpu_custom_call.1}
  #allocation0 [shape = 'u32[]', space=smem, size = 0x4, offset = 0x4, fixed_abs, tag = 'smem constant byte address 0x4 - core index']
  #allocation1 [shape = 'u32[144,128]{1,0:T(1,128)}', space=vmem, size = 0x12000, scoped, tag = 'internal scratch']
  %s0 = inlined_call_operand.hbm [shape: f32[2,64,256], index: 0, kind: input, shape index: {}]
  %s1 = inlined_call_operand.vmem [shape: f32[4,64], index: 1, kind: input, shape index: {}]
  %s2 = inlined_call_operand.vmem [shape: f32[64,4], index: 2, kind: input, shape index: {}]
  %s3 = inlined_call_operand.hbm [shape: f32[2,64,256], index: 3, kind: output, shape index: {}]
  %s4 = sld [smem:[#allocation0]]
  $region49: #{tpu_custom_call.1} parent=0
    _
  %s6 = ssub.s32 1, %s4
  %s7 = scalar_select 0, %s6, %s4
  $region1: #{tpu_custom_call.1} parent=0
    #allocation2 [shape = 'u8[131072]{0}', space=vmem, size = 0x20000, scoped, tag = 'input window, operand 0']
    #allocation3 [shape = 's32[2]{0}', space=sflag, size = 0x8, scoped, tag = 'scoped memory for tpu_custom_call.1']
    #allocation4 [shape = 's32[2]{0}', space=sflag, size = 0x8, scoped, tag = 'scoped memory for tpu_custom_call.1']
    #allocation5 [shape = 'u8[131072]{0}', space=vmem, size = 0x20000, scoped, tag = 'output window, operand 0']
    %8 = vsyncpa [#allocation3], 0
    %s9 = scalar_lea.sflag [#allocation3], 1
    %10 = vsyncpa %s9, 0
    %11 = vsyncpa [#allocation4], 0
    %s12 = scalar_lea.sflag [#allocation4], 1
    %13 = vsyncpa %s12, 0
    loop: start=0, step=1, limit=4
    $region2: #{tpu_custom_call.1} parent=1 // loop_pre_header
      _
    $region3: #{tpu_custom_call.1} parent=1 // loop_header
      %s15 = sphi 0, %s19
      %p16 = scmp.ge.s32.totalorder %s15, 4
      %s25 = sphi 0, %s27
      %s28 = sphi 0, %s25
      %s29 = sphi 0, %s28
      %s45 = sphi 0, %s29
      %s49 = sphi 0, %s49
      %s51 = sphi 0, %s49
      %s52 = sphi 0, %s51
      %s66 = sphi 0, %s52
      %s70 = sphi 0, %s70
      %s72 = sphi 0, %s70
      %s73 = sphi 0, %s72
      %s87 = sphi 0, %s73
      %s93 = sphi 0, %s95
      %s96 = sphi 0, %s93
      %s97 = sphi 0, %s96
      %s113 = sphi 0, %s97
    $region4: #{tpu_custom_call.1} parent=1 // loop_header_branch
      %18 = sbr.rel (%p16) target = $region8
    $region5: #{tpu_custom_call.1} parent=1 // loop_body
      %s20 = ssub.s32 %s15, 1
      %s21 = ssub.s32 %s15, 2
      %s22 = sadd.s32 %s15, 1
      %s23 = ssub.s32 %s15, %s22
      %p24 = scmp.eq.s32.totalorder %s23, 0
      %s26 = sadd.s32 %s25, 1
      %s27 = scalar_select %p24, %s25, %s26
      %p30 = pneg %p24
      %p31 = scmp.eq.s32.totalorder %s15, 1
      %p32 = por %p30, %p31
      %p33 = scmp.ne.s32.totalorder %s25, %s28
      %p34 = scmp.eq.s32.totalorder %s15, 0
      %p35 = por %p33, %p34
      %p36 = scmp.ne.s32.totalorder %s25, %s28
      %p37 = scmp.eq.s32.totalorder %s20, 1
      %p38 = por %p36, %p37
      %p39 = scmp.ne.s32.totalorder %s28, %s29
      %p40 = scmp.eq.s32.totalorder %s20, 0
      %p41 = por %p39, %p40
      %p42 = scmp.ne.s32.totalorder %s28, %s29
      %p43 = scmp.eq.s32.totalorder %s21, 1
      %p44 = por %p42, %p43
      %p46 = scmp.ne.s32.totalorder %s29, %s45
      %p47 = scmp.eq.s32.totalorder %s21, 0
      %p48 = por %p46, %p47
      %s50 = sadd.s32 %s49, 1
      %p53 = scmp.eq.s32.totalorder %s15, 1
      %p54 = scmp.ne.s32.totalorder %s49, %s51
      %p55 = scmp.eq.s32.totalorder %s15, 0
      %p56 = por %p54, %p55
      %p57 = scmp.ne.s32.totalorder %s49, %s51
      %p58 = scmp.eq.s32.totalorder %s20, 1
      %p59 = por %p57, %p58
      %p60 = scmp.ne.s32.totalorder %s51, %s52
      %p61 = scmp.eq.s32.totalorder %s20, 0
      %p62 = por %p60, %p61
      %p63 = scmp.ne.s32.totalorder %s51, %s52
      %p64 = scmp.eq.s32.totalorder %s21, 1
      %p65 = por %p63, %p64
      %p67 = scmp.ne.s32.totalorder %s52, %s66
      %p68 = scmp.eq.s32.totalorder %s21, 0
      %p69 = por %p67, %p68
      %s71 = sadd.s32 %s70, 1
      %p74 = scmp.eq.s32.totalorder %s15, 1
      %p75 = scmp.ne.s32.totalorder %s70, %s72
      %p76 = scmp.eq.s32.totalorder %s15, 0
      %p77 = por %p75, %p76
      %p78 = scmp.ne.s32.totalorder %s70, %s72
      %p79 = scmp.eq.s32.totalorder %s20, 1
      %p80 = por %p78, %p79
      %p81 = scmp.ne.s32.totalorder %s72, %s73
      %p82 = scmp.eq.s32.totalorder %s20, 0
      %p83 = por %p81, %p82
      %p84 = scmp.ne.s32.totalorder %s72, %s73
      %p85 = scmp.eq.s32.totalorder %s21, 1
      %p86 = por %p84, %p85
      %p88 = scmp.ne.s32.totalorder %s73, %s87
      %p89 = scmp.eq.s32.totalorder %s21, 0
      %p90 = por %p88, %p89
      %s91 = ssub.s32 %s15, %s22
      %p92 = scmp.eq.s32.totalorder %s91, 0
      %s94 = sadd.s32 %s93, 1
      %s95 = scalar_select %p92, %s93, %s94
      %p98 = pneg %p92
      %p99 = scmp.eq.s32.totalorder %s15, 1
      %p100 = por %p98, %p99
      %p101 = scmp.ne.s32.totalorder %s93, %s96
      %p102 = scmp.eq.s32.totalorder %s15, 0
      %p103 = por %p101, %p102
      %p104 = scmp.ne.s32.totalorder %s93, %s96
      %p105 = scmp.eq.s32.totalorder %s20, 1
      %p106 = por %p104, %p105
      %p107 = scmp.ne.s32.totalorder %s96, %s97
      %p108 = scmp.eq.s32.totalorder %s20, 0
      %p109 = por %p107, %p108
      %p110 = scmp.ne.s32.totalorder %s96, %s97
      %p111 = scmp.eq.s32.totalorder %s21, 1
      %p112 = por %p110, %p111
      %p114 = scmp.ne.s32.totalorder %s97, %s113
      %p115 = scmp.eq.s32.totalorder %s21, 0
      %p116 = por %p114, %p115
      %p117 = scmp.le.s32.totalorder 1, %s15
      %p118 = scmp.lt.s32.totalorder %s15, 3
      %p119 = pnand %p117, %p118
      %p120 = pneg %p119
      // Predicated region
      $region9: #{tpu_custom_call.1} parent=5 // pred_check
        _
      $region10: #{tpu_custom_call.1} parent=5 // pred_check_branch
        %122 = sbr.rel (%p119) target = $region12
      $region11: #{tpu_custom_call.1} parent=5 // pred_region
        %s123 = ssub.s32 %s15, 1
        // Predicated region
        $region13: #{tpu_custom_call.1} parent=11 // pred_check
          %p124 = pneg %p62
        $region14: #{tpu_custom_call.1} parent=11 // pred_check_branch
          %126 = sbr.rel (%p124) target = $region16
        $region15: #{tpu_custom_call.1} parent=11 // pred_region
          _
        $region16: #{tpu_custom_call.1} parent=11 // pred_fallthru
          _
        // Predicated region
        $region17: #{tpu_custom_call.1} parent=11 // pred_check
          %p127 = pneg %p83
        $region18: #{tpu_custom_call.1} parent=11 // pred_check_branch
          %129 = sbr.rel (%p127) target = $region20
        $region19: #{tpu_custom_call.1} parent=11 // pred_region
          _
        $region20: #{tpu_custom_call.1} parent=11 // pred_fallthru
          _
      $region12: #{tpu_custom_call.1} parent=5 // pred_fallthru
        _
      %p130 = scmp.lt.s32.totalorder %s15, 2
      // Predicated region
      $region21: #{tpu_custom_call.1} parent=5 // pred_check
        %p131 = pneg %p130
      $region22: #{tpu_custom_call.1} parent=5 // pred_check_branch
        %133 = sbr.rel (%p131) target = $region24
      $region23: #{tpu_custom_call.1} parent=5 // pred_region
        // Predicated region
        $region25: #{tpu_custom_call.1} parent=23 // pred_check
          %p134 = pneg %p35
        $region26: #{tpu_custom_call.1} parent=23 // pred_check_branch
          %136 = sbr.rel (%p134) target = $region28
        $region27: #{tpu_custom_call.1} parent=23 // pred_region
          %s137 = sand.u32 %s25, 1
          %s138 = scalar_lea.sflag [#allocation3], %s137
          %s139 = sand.u32 %s25, 1
          %s140 = smul.addr %s139, 128
          %s141 = scalar_lea.vmem [#allocation2], %s140
          %s143 = ssub.s32 2048, 2048
          %144 = vsyncadd %s138, %s143
          %s145 = smul.addr %s15, 16
          %s146 = smul.addr %s145, 128
          %s147 = scalar_lea.hbm %s0, %s146
          %s148 = sshll.u32 %s141, 4
          %s149 = int_to_ptr.vmem [resolvable:$true] %s148
          %154 = dma.hbm_to_vmem [thread:$0]  %s147, 2048, %s149, %s138, 256, 256, 16
        $region28: #{tpu_custom_call.1} parent=23 // pred_fallthru
          _
      $region24: #{tpu_custom_call.1} parent=5 // pred_fallthru
        _
      %p155 = scmp.le.s32.totalorder 1, %s15
      %p156 = scmp.lt.s32.totalorder %s15, 3
      %p157 = pnand %p155, %p156
      %p158 = pneg %p157
      // Predicated region
      $region29: #{tpu_custom_call.1} parent=5 // pred_check
        _
      $region30: #{tpu_custom_call.1} parent=5 // pred_check_branch
        %160 = sbr.rel (%p157) target = $region32
      $region31: #{tpu_custom_call.1} parent=5 // pred_region
        %s161 = ssub.s32 %s15, 1
        %s162 = sand.u32 %s28, 1
        %s163 = scalar_lea.sflag [#allocation3], %s162
        %s164 = sand.u32 %s28, 1
        %s165 = smul.addr %s164, 128
        %s166 = scalar_lea.vmem [#allocation2], %s165
        // Predicated region
        $region33: #{tpu_custom_call.1} parent=31 // pred_check
          %p167 = pneg %p41
        $region34: #{tpu_custom_call.1} parent=31 // pred_check_branch
          %169 = sbr.rel (%p167) target = $region36
        $region35: #{tpu_custom_call.1} parent=31 // pred_region
          %170 = dma.done %s163, 2048
        $region36: #{tpu_custom_call.1} parent=31 // pred_fallthru
          _
        %s171 = sand.u32 %s28, 1
        %s172 = scalar_lea.sflag [#allocation3], %s171
        %s173 = sand.u32 %s28, 1
        %s174 = smul.addr %s173, 128
        %s175 = scalar_lea.vmem [#allocation2], %s174
        %p176 = pneg %p41
        %p177 = pneg %p38
        %p178 = pneg %p62
        %p179 = pneg %p59
        %p180 = pneg %p83
        %p181 = pneg %p80
        %p182 = pneg %p109
        %p183 = pneg %p106
        %s184 = sand.u32 %s96, 1
        %s185 = scalar_lea.sflag [#allocation4], %s184
        %s186 = sand.u32 %s96, 1
        %s187 = smul.addr %s186, 128
        %s188 = scalar_lea.vmem [#allocation5], %s187
        %v189 = vld [vmem:[%s166] sm:$0xff]
        %v190 = vld [vmem:[%s166 + $0x8] sm:$0xff]
        %v191 = vld [vmem:[%s166 + $0x10] sm:$0xff]
        %v192 = vld [vmem:[%s166 + $0x18] sm:$0xff]
        %v193 = vld [vmem:[%s166 + $0x20] sm:$0xff]
        %v194 = vld [vmem:[%s166 + $0x28] sm:$0xff]
        %v195 = vld [vmem:[%s166 + $0x30] sm:$0xff]
        %v196 = vld [vmem:[%s166 + $0x38] sm:$0xff]
        %v197 = vld [vmem:[%s166 + $0x40] sm:$0xff]
        %v198 = vld [vmem:[%s166 + $0x48] sm:$0xff]
        %v199 = vld [vmem:[%s166 + $0x50] sm:$0xff]
        %v200 = vld [vmem:[%s166 + $0x58] sm:$0xff]
        %v201 = vld [vmem:[%s166 + $0x60] sm:$0xff]
        %v202 = vld [vmem:[%s166 + $0x68] sm:$0xff]
        %v203 = vld [vmem:[%s166 + $0x70] sm:$0xff]
        %v204 = vld [vmem:[%s166 + $0x78] sm:$0xff]
        %v205 = vadd.f32 %v189, %v190
        %206 = vadd.xlane.f32.xlu0 %v205
        %v207 = vpop.xlane.xlu0 %206
        %v208 = vadd.f32 %v191, %v192
        %209 = vadd.xlane.f32.xlu0 %v208
        %v210 = vpop.xlane.xlu0 %209
        %v211 = vadd.f32 %v193, %v194
        %212 = vadd.xlane.f32.xlu0 %v211
        %v213 = vpop.xlane.xlu0 %212
        %v214 = vadd.f32 %v195, %v196
        %215 = vadd.xlane.f32.xlu0 %v214
        %v216 = vpop.xlane.xlu0 %215
        %v217 = vadd.f32 %v197, %v198
        %218 = vadd.xlane.f32.xlu0 %v217
        %v219 = vpop.xlane.xlu0 %218
        %v220 = vadd.f32 %v199, %v200
        %221 = vadd.xlane.f32.xlu0 %v220
        %v222 = vpop.xlane.xlu0 %221
        %v223 = vadd.f32 %v201, %v202
        %224 = vadd.xlane.f32.xlu0 %v223
        %v225 = vpop.xlane.xlu0 %224
        %v226 = vadd.f32 %v203, %v204
        %227 = vadd.xlane.f32.xlu0 %v226
        %v228 = vpop.xlane.xlu0 %227
        %v229 = vmul.f32 %v207, 0.00390625
        %v230 = vmul.f32 %v210, 0.00390625
        %v231 = vmul.f32 %v213, 0.00390625
        %v232 = vmul.f32 %v216, 0.00390625
        %v233 = vmul.f32 %v219, 0.00390625
        %v234 = vmul.f32 %v222, 0.00390625
        %v235 = vmul.f32 %v225, 0.00390625
        %v236 = vmul.f32 %v228, 0.00390625
        %v237 = vmax.f32 %v189, %v190
        %238 = vmax.xlane.f32.xlu0 %v237
        %v239 = vpop.xlane.xlu0 %238
        %v240 = vmax.f32 %v191, %v192
        %241 = vmax.xlane.f32.xlu0 %v240
        %v242 = vpop.xlane.xlu0 %241
        %v243 = vmax.f32 %v193, %v194
        %244 = vmax.xlane.f32.xlu0 %v243
        %v245 = vpop.xlane.xlu0 %244
        %v246 = vmax.f32 %v195, %v196
        %247 = vmax.xlane.f32.xlu0 %v246
        %v248 = vpop.xlane.xlu0 %247
        %v249 = vmax.f32 %v197, %v198
        %250 = vmax.xlane.f32.xlu0 %v249
        %v251 = vpop.xlane.xlu0 %250
        %v252 = vmax.f32 %v199, %v200
        %253 = vmax.xlane.f32.xlu0 %v252
        %v254 = vpop.xlane.xlu0 %253
        %v255 = vmax.f32 %v201, %v202
        %256 = vmax.xlane.f32.xlu0 %v255
        %v257 = vpop.xlane.xlu0 %256
        %v258 = vmax.f32 %v203, %v204
        %259 = vmax.xlane.f32.xlu0 %v258
        %v260 = vpop.xlane.xlu0 %259
        %vm261 = vcmask 7168
        %v262 = vsel %vm261, %v229, %v239
        %v263 = vsel %vm261, %v230, %v242
        %v264 = vsel %vm261, %v231, %v245
        %v265 = vsel %vm261, %v232, %v248
        %v266 = vsel %vm261, %v233, %v251
        %v267 = vsel %vm261, %v234, %v254
        %v268 = vsel %vm261, %v235, %v257
        %v269 = vsel %vm261, %v236, %v260
        %v270 = vld [vmem:[%s1] sm:$0xf]
        %v271 = vld [vmem:[%s2] sm:$0xff]
        %v272 = vld [vmem:[%s2 + $0x8] sm:$0xff]
        %v273 = vld [vmem:[%s2 + $0x10] sm:$0xff]
        %v274 = vld [vmem:[%s2 + $0x18] sm:$0xff]
        %v275 = vld [vmem:[%s2 + $0x20] sm:$0xff]
        %v276 = vld [vmem:[%s2 + $0x28] sm:$0xff]
        %v277 = vld [vmem:[%s2 + $0x30] sm:$0xff]
        %v278 = vld [vmem:[%s2 + $0x38] sm:$0xff]
        %vm279 = vcmask 523264
        %v281 = vsel %vm279, %v270, 0
        %283 = vmatprep.subr.mxu0 0.0
        %284 = vmatpush1.msra.mxu0 %v262
        %285 = vmatprep.subr.mxu0 0.0
        %286 = vmatpush1.msra.mxu0 %v263
        %287 = vmatprep.subr.mxu0 0.0
        %288 = vmatpush1.msra.mxu0 %v264
        %289 = vmatprep.subr.mxu0 0.0
        %290 = vmatpush1.msra.mxu0 %v265
        %291 = vmatprep.subr.mxu0 0.0
        %292 = vmatpush1.msra.mxu0 %v266
        %293 = vmatprep.subr.mxu0 0.0
        %294 = vmatpush1.msra.mxu0 %v267
        %295 = vmatprep.subr.mxu0 0.0
        %296 = vmatpush1.msra.mxu0 %v268
        %297 = vmatprep.subr.mxu0 0.0
        %298 = vmatpush1.msra.mxu0 %v269
        %299 = vmatprep.subr.mxu0 0.0
        %300 = vmatpush1.msra.mxu0 0.0
        %301 = vmatprep.subr.mxu0 0.0
        %302 = vmatpush1.msra.mxu0 0.0
        %303 = vmatprep.subr.mxu0 0.0
        %304 = vmatpush1.msra.mxu0 0.0
        %305 = vmatprep.subr.mxu0 0.0
        %306 = vmatpush1.msra.mxu0 0.0
        %307 = vmatprep.subr.mxu0 0.0
        %308 = vmatpush1.msra.mxu0 0.0
        %309 = vmatprep.subr.mxu0 0.0
        %310 = vmatpush1.msra.mxu0 0.0
        %311 = vmatprep.subr.mxu0 0.0
        %312 = vmatpush1.msra.mxu0 0.0
        %313 = vmatprep.subr.mxu0 0.0
        %314 = vmatpush1.msra.mxu0 0.0
        %315 = vmatprep.subr.mxu0 0.0
        %316 = vmatpush1.msra.mxu0 0.0
        %317 = vmatprep.subr.mxu0 0.0
        %318 = vmatpush1.msra.mxu0 0.0
        %319 = vmatprep.subr.mxu0 0.0
        %320 = vmatpush1.msra.mxu0 0.0
        %321 = vmatprep.subr.mxu0 0.0
        %322 = vmatpush1.msra.mxu0 0.0
        %323 = vmatprep.subr.mxu0 0.0
        %324 = vmatpush1.msra.mxu0 0.0
        %325 = vmatprep.subr.mxu0 0.0
        %326 = vmatpush1.msra.mxu0 0.0
        %327 = vmatprep.subr.mxu0 0.0
        %328 = vmatpush1.msra.mxu0 0.0
        %329 = vmatprep.subr.mxu0 0.0
        %330 = vmatpush1.msra.mxu0 0.0
        %331 = vmatprep.subr.mxu0 0.0
        %332 = vmatpush1.msra.mxu0 0.0
        %333 = vmatprep.subr.mxu0 0.0
        %334 = vmatpush1.msra.mxu0 0.0
        %335 = vmatprep.subr.mxu0 0.0
        %336 = vmatpush1.msra.mxu0 0.0
        %337 = vmatprep.subr.mxu0 0.0
        %338 = vmatpush1.msra.mxu0 0.0
        %339 = vmatprep.subr.mxu0 0.0
        %340 = vmatpush1.msra.mxu0 0.0
        %341 = vmatprep.subr.mxu0 0.0
        %342 = vmatpush1.msra.mxu0 0.0
        %343 = vmatprep.subr.mxu0 0.0
        %344 = vmatpush1.msra.mxu0 0.0
        %345 = vmatprep.subr.mxu0 0.0
        %346 = vmatpush1.msra.mxu0 0.0
        %347 = vmatprep.mubr.f32.mxu0 0.0
        %348 = vmatmul.mubr.f32.gmra.mrb[0].mxu0 %v281
        %v349 = vpop.f32.mrb[0].mxu0
        %v350 = vadd.f32 0.0, %v349
        %v351 = vpop.f32.mrb[0].mxu0
        %352 = vdwg.mxu0
        %v353 = vmax.f32 %v350, 0.0
        %vm354 = vcmask 31744
        %v356 = vsel %vm354, %v271, 0
        %v359 = vsel %vm354, %v272, 0
        %v362 = vsel %vm354, %v273, 0
        %v365 = vsel %vm354, %v274, 0
        %v368 = vsel %vm354, %v275, 0
        %v371 = vsel %vm354, %v276, 0
        %v374 = vsel %vm354, %v277, 0
        %v377 = vsel %vm354, %v278, 0
        %vm379 = vcmask 1043456
        %v381 = vsel %vm379, %v353, 0
        %383 = vmatprep.subr.mxu0 0.0
        %384 = vmatpush1.msra.mxu0 %v381
        %385 = vmatprep.subr.mxu0 0.0
        %386 = vmatpush1.msra.mxu0 0.0
        %387 = vmatprep.subr.mxu0 0.0
        %388 = vmatpush1.msra.mxu0 0.0
        %389 = vmatprep.subr.mxu0 0.0
        %390 = vmatpush1.msra.mxu0 0.0
        %391 = vmatprep.subr.mxu0 0.0
        %392 = vmatpush1.msra.mxu0 0.0
        %393 = vmatprep.subr.mxu0 0.0
        %394 = vmatpush1.msra.mxu0 0.0
        %395 = vmatprep.subr.mxu0 0.0
        %396 = vmatpush1.msra.mxu0 0.0
        %397 = vmatprep.subr.mxu0 0.0
        %398 = vmatpush1.msra.mxu0 0.0
        %399 = vmatprep.subr.mxu0 0.0
        %400 = vmatpush1.msra.mxu0 0.0
        %401 = vmatprep.subr.mxu0 0.0
        %402 = vmatpush1.msra.mxu0 0.0
        %403 = vmatprep.subr.mxu0 0.0
        %404 = vmatpush1.msra.mxu0 0.0
        %405 = vmatprep.subr.mxu0 0.0
        %406 = vmatpush1.msra.mxu0 0.0
        %407 = vmatprep.subr.mxu0 0.0
        %408 = vmatpush1.msra.mxu0 0.0
        %409 = vmatprep.subr.mxu0 0.0
        %410 = vmatpush1.msra.mxu0 0.0
        %411 = vmatprep.subr.mxu0 0.0
        %412 = vmatpush1.msra.mxu0 0.0
        %413 = vmatprep.subr.mxu0 0.0
        %414 = vmatpush1.msra.mxu0 0.0
        %415 = vmatprep.subr.mxu0 0.0
        %416 = vmatpush1.msra.mxu0 0.0
        %417 = vmatprep.subr.mxu0 0.0
        %418 = vmatpush1.msra.mxu0 0.0
        %419 = vmatprep.subr.mxu0 0.0
        %420 = vmatpush1.msra.mxu0 0.0
        %421 = vmatprep.subr.mxu0 0.0
        %422 = vmatpush1.msra.mxu0 0.0
        %423 = vmatprep.subr.mxu0 0.0
        %424 = vmatpush1.msra.mxu0 0.0
        %425 = vmatprep.subr.mxu0 0.0
        %426 = vmatpush1.msra.mxu0 0.0
        %427 = vmatprep.subr.mxu0 0.0
        %428 = vmatpush1.msra.mxu0 0.0
        %429 = vmatprep.subr.mxu0 0.0
        %430 = vmatpush1.msra.mxu0 0.0
        %431 = vmatprep.subr.mxu0 0.0
        %432 = vmatpush1.msra.mxu0 0.0
        %433 = vmatprep.subr.mxu0 0.0
        %434 = vmatpush1.msra.mxu0 0.0
        %435 = vmatprep.subr.mxu0 0.0
        %436 = vmatpush1.msra.mxu0 0.0
        %437 = vmatprep.subr.mxu0 0.0
        %438 = vmatpush1.msra.mxu0 0.0
        %439 = vmatprep.subr.mxu0 0.0
        %440 = vmatpush1.msra.mxu0 0.0
        %441 = vmatprep.subr.mxu0 0.0
        %442 = vmatpush1.msra.mxu0 0.0
        %443 = vmatprep.subr.mxu0 0.0
        %444 = vmatpush1.msra.mxu0 0.0
        %445 = vmatprep.subr.mxu0 0.0
        %446 = vmatpush1.msra.mxu0 0.0
        %447 = vmatprep.mubr.f32.mxu0 0.0
        %448 = vmatmul.mubr.f32.gmra.mrb[0].mxu0 %v356
        %v449 = vpop.f32.mrb[0].mxu0
        %v450 = vadd.f32 0.0, %v449
        %v451 = vpop.f32.mrb[0].mxu0
        %452 = vmatprep.mubr.f32.mxu0 0.0
        %453 = vmatmul.mubr.f32.gmra.mrb[0].mxu0 %v359
        %v454 = vpop.f32.mrb[0].mxu0
        %v455 = vadd.f32 0.0, %v454
        %v456 = vpop.f32.mrb[0].mxu0
        %457 = vmatprep.mubr.f32.mxu0 0.0
        %458 = vmatmul.mubr.f32.gmra.mrb[0].mxu0 %v362
        %v459 = vpop.f32.mrb[0].mxu0
        %v460 = vadd.f32 0.0, %v459
        %v461 = vpop.f32.mrb[0].mxu0
        %462 = vmatprep.mubr.f32.mxu0 0.0
        %463 = vmatmul.mubr.f32.gmra.mrb[0].mxu0 %v365
        %v464 = vpop.f32.mrb[0].mxu0
        %v465 = vadd.f32 0.0, %v464
        %v466 = vpop.f32.mrb[0].mxu0
        %467 = vmatprep.mubr.f32.mxu0 0.0
        %468 = vmatmul.mubr.f32.gmra.mrb[0].mxu0 %v368
        %v469 = vpop.f32.mrb[0].mxu0
        %v470 = vadd.f32 0.0, %v469
        %v471 = vpop.f32.mrb[0].mxu0
        %472 = vmatprep.mubr.f32.mxu0 0.0
        %473 = vmatmul.mubr.f32.gmra.mrb[0].mxu0 %v371
        %v474 = vpop.f32.mrb[0].mxu0
        %v475 = vadd.f32 0.0, %v474
        %v476 = vpop.f32.mrb[0].mxu0
        %477 = vmatprep.mubr.f32.mxu0 0.0
        %478 = vmatmul.mubr.f32.gmra.mrb[0].mxu0 %v374
        %v479 = vpop.f32.mrb[0].mxu0
        %v480 = vadd.f32 0.0, %v479
        %v481 = vpop.f32.mrb[0].mxu0
        %482 = vmatprep.mubr.f32.mxu0 0.0
        %483 = vmatmul.mubr.f32.gmra.mrb[0].mxu0 %v377
        %v484 = vpop.f32.mrb[0].mxu0
        %v485 = vadd.f32 0.0, %v484
        %v486 = vpop.f32.mrb[0].mxu0
        %487 = vdwg.mxu0
        %496 = vrot.lane.b32.xlu0 %v450, 127
        %v497 = vpop.permute.xlu0 %496
        %498 = vrot.lane.b32.xlu0 %v455, 127
        %v499 = vpop.permute.xlu0 %498
        %500 = vrot.lane.b32.xlu0 %v460, 127
        %v501 = vpop.permute.xlu0 %500
        %502 = vrot.lane.b32.xlu0 %v465, 127
        %v503 = vpop.permute.xlu0 %502
        %504 = vrot.lane.b32.xlu0 %v470, 127
        %v505 = vpop.permute.xlu0 %504
        %506 = vrot.lane.b32.xlu0 %v475, 127
        %v507 = vpop.permute.xlu0 %506
        %508 = vrot.lane.b32.xlu0 %v480, 127
        %v509 = vpop.permute.xlu0 %508
        %510 = vrot.lane.b32.xlu0 %v485, 127
        %v511 = vpop.permute.xlu0 %510
        %v520 = vadd.f32 %v450, %v497
        %v521 = vadd.f32 %v455, %v499
        %v522 = vadd.f32 %v460, %v501
        %v523 = vadd.f32 %v465, %v503
        %v524 = vadd.f32 %v470, %v505
        %v525 = vadd.f32 %v475, %v507
        %v526 = vadd.f32 %v480, %v509
        %v527 = vadd.f32 %v485, %v511
        %v528 = vxor.u32 %v520, 2147483648
        %v529 = vxor.u32 %v521, 2147483648
        %v530 = vxor.u32 %v522, 2147483648
        %v531 = vxor.u32 %v523, 2147483648
        %v532 = vxor.u32 %v524, 2147483648
        %v533 = vxor.u32 %v525, 2147483648
        %v534 = vxor.u32 %v526, 2147483648
        %v535 = vxor.u32 %v527, 2147483648
        %v536 = vmul.f32 %v528, 1.442695
        %v537 = vpow.pop %v536
        %v538 = vmul.f32 %v529, 1.442695
        %v539 = vpow.pop %v538
        %v540 = vmul.f32 %v530, 1.442695
        %v541 = vpow.pop %v540
        %v542 = vmul.f32 %v531, 1.442695
        %v543 = vpow.pop %v542
        %v544 = vmul.f32 %v532, 1.442695
        %v545 = vpow.pop %v544
        %v546 = vmul.f32 %v533, 1.442695
        %v547 = vpow.pop %v546
        %v548 = vmul.f32 %v534, 1.442695
        %v549 = vpow.pop %v548
        %v550 = vmul.f32 %v535, 1.442695
        %v551 = vpow.pop %v550
        %v552 = vadd.f32 %v537, 1.0
        %v553 = vadd.f32 %v539, 1.0
        %v554 = vadd.f32 %v541, 1.0
        %v555 = vadd.f32 %v543, 1.0
        %v556 = vadd.f32 %v545, 1.0
        %v557 = vadd.f32 %v547, 1.0
        %v558 = vadd.f32 %v549, 1.0
        %v559 = vadd.f32 %v551, 1.0
        %v560 = vrcp.pop %v552
        %v561 = vmul.f32 1.0, %v560
        %v562 = vrcp.pop %v553
        %v563 = vmul.f32 1.0, %v562
        %v564 = vrcp.pop %v554
        %v565 = vmul.f32 1.0, %v564
        %v566 = vrcp.pop %v555
        %v567 = vmul.f32 1.0, %v566
        %v568 = vrcp.pop %v556
        %v569 = vmul.f32 1.0, %v568
        %v570 = vrcp.pop %v557
        %v571 = vmul.f32 1.0, %v570
        %v572 = vrcp.pop %v558
        %v573 = vmul.f32 1.0, %v572
        %v574 = vrcp.pop %v559
        %v575 = vmul.f32 1.0, %v574
        %577 = vset.pattern.permute.xlu0 0
        %578 = vperm.xlu0 %577, %v561
        %v579 = vpop.permute.xlu0 %578
        %582 = vset.pattern.permute.xlu0 0
        %583 = vperm.xlu0 %582, %v563
        %v584 = vpop.permute.xlu0 %583
        %587 = vset.pattern.permute.xlu0 0
        %588 = vperm.xlu0 %587, %v565
        %v589 = vpop.permute.xlu0 %588
        %592 = vset.pattern.permute.xlu0 0
        %593 = vperm.xlu0 %592, %v567
        %v594 = vpop.permute.xlu0 %593
        %597 = vset.pattern.permute.xlu0 0
        %598 = vperm.xlu0 %597, %v569
        %v599 = vpop.permute.xlu0 %598
        %602 = vset.pattern.permute.xlu0 0
        %603 = vperm.xlu0 %602, %v571
        %v604 = vpop.permute.xlu0 %603
        %607 = vset.pattern.permute.xlu0 0
        %608 = vperm.xlu0 %607, %v573
        %v609 = vpop.permute.xlu0 %608
        %612 = vset.pattern.permute.xlu0 0
        %613 = vperm.xlu0 %612, %v575
        %v614 = vpop.permute.xlu0 %613
        %v616 = vmul.f32 %v579, %v189
        %v617 = vmul.f32 %v579, %v190
        %v618 = vmul.f32 %v584, %v191
        %v619 = vmul.f32 %v584, %v192
        %v620 = vmul.f32 %v589, %v193
        %v621 = vmul.f32 %v589, %v194
        %v622 = vmul.f32 %v594, %v195
        %v623 = vmul.f32 %v594, %v196
        %v624 = vmul.f32 %v599, %v197
        %v625 = vmul.f32 %v599, %v198
        %v626 = vmul.f32 %v604, %v199
        %v627 = vmul.f32 %v604, %v200
        %v628 = vmul.f32 %v609, %v201
        %v629 = vmul.f32 %v609, %v202
        %v630 = vmul.f32 %v614, %v203
        %v631 = vmul.f32 %v614, %v204
        %632 = vst [vmem:[%s188] sm:$0xff] %v616
        %633 = vst [vmem:[%s188 + $0x8] sm:$0xff] %v617
        %634 = vst [vmem:[%s188 + $0x10] sm:$0xff] %v618
        %635 = vst [vmem:[%s188 + $0x18] sm:$0xff] %v619
        %636 = vst [vmem:[%s188 + $0x20] sm:$0xff] %v620
        %637 = vst [vmem:[%s188 + $0x28] sm:$0xff] %v621
        %638 = vst [vmem:[%s188 + $0x30] sm:$0xff] %v622
        %639 = vst [vmem:[%s188 + $0x38] sm:$0xff] %v623
        %640 = vst [vmem:[%s188 + $0x40] sm:$0xff] %v624
        %641 = vst [vmem:[%s188 + $0x48] sm:$0xff] %v625
        %642 = vst [vmem:[%s188 + $0x50] sm:$0xff] %v626
        %643 = vst [vmem:[%s188 + $0x58] sm:$0xff] %v627
        %644 = vst [vmem:[%s188 + $0x60] sm:$0xff] %v628
        %645 = vst [vmem:[%s188 + $0x68] sm:$0xff] %v629
        %646 = vst [vmem:[%s188 + $0x70] sm:$0xff] %v630
        %647 = vst [vmem:[%s188 + $0x78] sm:$0xff] %v631
        %s648 = sand.u32 %s96, 1
        %s649 = scalar_lea.sflag [#allocation4], %s648
        %s650 = sand.u32 %s96, 1
        %s651 = smul.addr %s650, 128
        %s652 = scalar_lea.vmem [#allocation5], %s651
        // Predicated region
        $region37: #{tpu_custom_call.1} parent=31 // pred_check
          %p653 = pneg %p106
        $region38: #{tpu_custom_call.1} parent=31 // pred_check_branch
          %655 = sbr.rel (%p653) target = $region40
        $region39: #{tpu_custom_call.1} parent=31 // pred_region
          %s657 = ssub.s32 2048, 2048
          %658 = vsyncadd %s649, %s657
          %s659 = smul.addr %s20, 16
          %s660 = smul.addr %s659, 128
          %s661 = scalar_lea.hbm %s3, %s660
          %s662 = sshll.u32 %s652, 4
          %s663 = int_to_ptr.vmem [resolvable:$true] %s662
          %668 = dma.vmem_to_hbm [thread:$0]  %s663, 2048, %s661, %s649, 256, 256, 16
        $region40: #{tpu_custom_call.1} parent=31 // pred_fallthru
          _
      $region32: #{tpu_custom_call.1} parent=5 // pred_fallthru
        _
      %p669 = scmp.le.s32.totalorder 2, %s15
      // Predicated region
      $region41: #{tpu_custom_call.1} parent=5 // pred_check
        %p670 = pneg %p669
      $region42: #{tpu_custom_call.1} parent=5 // pred_check_branch
        %672 = sbr.rel (%p670) target = $region44
      $region43: #{tpu_custom_call.1} parent=5 // pred_region
        %s673 = ssub.s32 %s15, 2
        // Predicated region
        $region45: #{tpu_custom_call.1} parent=43 // pred_check
          %p674 = pneg %p112
        $region46: #{tpu_custom_call.1} parent=43 // pred_check_branch
          %676 = sbr.rel (%p674) target = $region48
        $region47: #{tpu_custom_call.1} parent=43 // pred_region
          %s677 = sand.u32 %s97, 1
          %s678 = scalar_lea.sflag [#allocation4], %s677
          %s679 = sand.u32 %s97, 1
          %s680 = smul.addr %s679, 128
          %s681 = scalar_lea.vmem [#allocation5], %s680
          %682 = dma.done %s678, 2048
        $region48: #{tpu_custom_call.1} parent=43 // pred_fallthru
          _
      $region44: #{tpu_custom_call.1} parent=5 // pred_fallthru
        _
    $region6: #{tpu_custom_call.1} parent=1 // loop_footer
      %s19 = sadd.s32 1, %s15
    $region7: #{tpu_custom_call.1} parent=1 // loop_footer_branch
      %14 = sbr.rel target = $region3
    $region8: #{tpu_custom_call.1} parent=1 // loop_exit
      _
    %683 = vsyncpa [#allocation3], 1
    %s684 = scalar_lea.sflag [#allocation3], 1
    %685 = vsyncpa %s684, 1
    %686 = vsyncpa [#allocation4], 1
    %s687 = scalar_lea.sflag [#allocation4], 1
    %688 = vsyncpa %s687, 1

</llo_original>
